<compile_context>
chip_gen: v5e
topology: v5e:2x2
jax: 0.10.0
libtpu: 0.0.40
codegen_flags: <defaults>
</compile_context>

<pallas_src>
import jax
import jax.numpy as jnp
from jax.experimental import pallas as pl
from jax.experimental.pallas import tpu as pltpu

_A_TILE = 512                     # lane-dense action-axis tile for the grid path
_FLAT_PARAM_BUDGET = 24 << 20     # W bytes above which we switch to the A-tiled path


def _round_up(n, m):
    return ((n + m - 1) // m) * m


def _policy_kernel(x_ref, w_ref, b_ref, o_ref):
    # x_ref: [B, D]   w_ref: [D, At]   b_ref: [1, At]   o_ref: [B, At]
    scores = jnp.dot(x_ref[...], w_ref[...], preferred_element_type=jnp.float32)
    o_ref[...] = (scores + b_ref[...]).astype(o_ref.dtype)


def make_policy_forward(w, b, typememory_param, *, use_bf16=False, force_grid=False):
    """Build a jitted forward: action_scores = x @ w + (b + typememory_param).

    All parameter preparation happens once here; the returned callable only
    handles `x` per call.
    """
    DIM, A = w.shape
    compute_dtype = jnp.bfloat16 if use_bf16 else jnp.float32
    itemsz = jnp.dtype(compute_dtype).itemsize

    # Fold TypeMemory's (zero) scalar parameter into the bias -- exact, and
    # removes one input stream from the kernel.  Done ONCE at init.
    b_f32 = (b.reshape(1, A).astype(jnp.float32)
             + typememory_param.reshape(1, 1).astype(jnp.float32))

    use_grid = force_grid or (DIM * A * itemsz > _FLAT_PARAM_BUDGET)

    if use_grid:
        # Pad the action axis (parameters only, once) to a multiple of the
        # lane-dense tile; per-call we slice the padded columns back off.
        Ap = _round_up(max(A, _A_TILE), _A_TILE)
        w_prep = jnp.zeros((DIM, Ap), compute_dtype).at[:, :A].set(w.astype(compute_dtype))
        b_prep = jnp.zeros((1, Ap), jnp.float32).at[:, :A].set(b_f32)
    else:
        Ap = A
        w_prep = w.astype(compute_dtype)
        b_prep = b_f32

    @jax.jit
    def forward(x):
        B, d = x.shape
        assert d == DIM, f"feature dim mismatch: {d} != {DIM}"
        x_c = x.astype(compute_dtype)

        if not use_grid:
            # Flat (grid-free) call: whole arrays resident in VMEM, one MXU pass.
            flat_bytes = (B * DIM + DIM * A) * itemsz + (A + B * A) * 4
            vmem_limit = int(min(max(2 * flat_bytes + (1 << 20), 16 << 20), 60 << 20))
            return pl.pallas_call(
                _policy_kernel,
                out_shape=jax.ShapeDtypeStruct((B, A), jnp.float32),
                in_specs=[
                    pl.BlockSpec(memory_space=pltpu.MemorySpace.VMEM),
                    pl.BlockSpec(memory_space=pltpu.MemorySpace.VMEM),
                    pl.BlockSpec(memory_space=pltpu.MemorySpace.VMEM),
                ],
                out_specs=pl.BlockSpec(memory_space=pltpu.MemorySpace.VMEM),
                compiler_params=pltpu.CompilerParams(vmem_limit_bytes=vmem_limit),
            )(x_c, w_prep, b_prep)

        # A-tiled grid path for large action spaces: x stays resident, W/bias/out
        # stream in lane-dense (DIM, 512) / (B, 512) blocks; the A axis is
        # "parallel" so v7x's two TensorCores split it.
        n_a = Ap // _A_TILE
        blk_bytes = (B * DIM * itemsz                # x (resident)
                     + 2 * DIM * _A_TILE * itemsz    # w, double-buffered
                     + 2 * _A_TILE * 4               # bias, double-buffered
                     + 2 * B * _A_TILE * 4)          # out, double-buffered
        vmem_limit = int(min(max(2 * blk_bytes + (1 << 20), 16 << 20), 60 << 20))

        out_p = pl.pallas_call(
            _policy_kernel,
            out_shape=jax.ShapeDtypeStruct((B, Ap), jnp.float32),
            grid_spec=pltpu.PrefetchScalarGridSpec(
                num_scalar_prefetch=0,
                grid=(n_a,),
                in_specs=[
                    pl.BlockSpec((B, DIM), lambda j: (0, 0)),
                    pl.BlockSpec((DIM, _A_TILE), lambda j: (0, j)),
                    pl.BlockSpec((1, _A_TILE), lambda j: (0, j)),
                ],
                out_specs=pl.BlockSpec((B, _A_TILE), lambda j: (0, j)),
            ),
            compiler_params=pltpu.CompilerParams(
                dimension_semantics=("parallel",),
                vmem_limit_bytes=vmem_limit,
            ),
        )(x_c, w_prep, b_prep)
        return out_p[:, :A] if Ap != A else out_p

    return forward


if __name__ == "__main__":
    key = jax.random.PRNGKey(0)
    k_x, k_w, k_b, k_x2, k_w2, k_b2 = jax.random.split(key, 6)

    # --- tiny-shape regime (flat path, no padding / no slice) ---
    B = 2          # batch of states
    DIM = 32       # state feature dimensionality (Actor.dim)
    N_ACTIONS = 8  # number of actions

    x = jax.random.normal(k_x, (B, DIM), dtype=jnp.float32)
    w = jax.random.normal(k_w, (DIM, N_ACTIONS), dtype=jnp.float32) * 0.1
    b = jax.random.normal(k_b, (N_ACTIONS,), dtype=jnp.float32) * 0.1
    typememory_param = jnp.zeros((1,), dtype=jnp.float32)  # Parameter(torch.zeros(1))

    policy_fwd = make_policy_forward(w, b, typememory_param)
    out = jax.block_until_ready(policy_fwd(x))

    ref = x @ w + b[None, :]
    assert out.shape == (B, N_ACTIONS)
    assert jnp.allclose(out, ref, atol=1e-5, rtol=1e-5)

    # --- exercise the A-tiled "parallel" grid path as well (forced) ---
    B2, D2, A2 = 8, 256, 1024
    x2 = jax.random.normal(k_x2, (B2, D2), dtype=jnp.float32)
    w2 = jax.random.normal(k_w2, (D2, A2), dtype=jnp.float32) * 0.05
    b2 = jax.random.normal(k_b2, (A2,), dtype=jnp.float32) * 0.1

    policy_fwd_big = make_policy_forward(w2, b2, typememory_param, force_grid=True)
    out2 = jax.block_until_ready(policy_fwd_big(x2))

    ref2 = x2 @ w2 + b2[None, :]
    assert out2.shape == (B2, A2)
    assert jnp.allclose(out2, ref2, atol=1e-4, rtol=1e-4)

    print("KERNEL_OK")
</pallas_src>

<mosaic_0001>
module attributes {stable_mosaic.version = 11 : i64} {
  func.func @_policy_kernel(%arg0: memref<2x32xf32, #tpu.memory_space<vmem>>, %arg1: memref<32x8xf32, #tpu.memory_space<vmem>>, %arg2: memref<1x8xf32, #tpu.memory_space<vmem>>, %arg3: memref<2x8xf32, #tpu.memory_space<vmem>>) attributes {dimension_semantics = [], scalar_prefetch = 0 : i64, scratch_operands = 0 : i64, tpu.core_type = #tpu.core_type<tc>} {
    %c0 = arith.constant 0 : index
    %c0_0 = arith.constant 0 : index
    %0 = vector.load %arg0[%c0, %c0_0] : memref<2x32xf32, #tpu.memory_space<vmem>>, vector<2x32xf32>
    %c0_1 = arith.constant 0 : index
    %c0_2 = arith.constant 0 : index
    %1 = vector.load %arg1[%c0_1, %c0_2] : memref<32x8xf32, #tpu.memory_space<vmem>>, vector<32x8xf32>
    %cst = arith.constant dense<0.000000e+00> : vector<2x8xf32>
    %2 = tpu.matmul %0, %1, %cst {dimension_numbers = #tpu.dot_dimension_numbers<[1], [0], [0], [1], [0, 0, 1, 1], [], []>} : vector<2x32xf32>, vector<32x8xf32>, vector<2x8xf32> -> vector<2x8xf32>
    %c0_3 = arith.constant 0 : index
    %c0_4 = arith.constant 0 : index
    %3 = vector.load %arg2[%c0_3, %c0_4] : memref<1x8xf32, #tpu.memory_space<vmem>>, vector<1x8xf32>
    %4 = vector.broadcast %3 : vector<1x8xf32> to vector<2x8xf32>
    %5 = arith.addf %2, %4 : vector<2x8xf32>
    %c0_5 = arith.constant 0 : index
    %c0_6 = arith.constant 0 : index
    %6 = vector.load %arg3[%c0_5, %c0_6] : memref<2x8xf32, #tpu.memory_space<vmem>>, vector<2x8xf32>
    tpu.vector_store %arg3[%c0_5, %c0_6], %5 {strides = array<i32>} : memref<2x8xf32, #tpu.memory_space<vmem>>, vector<2x8xf32>,
    return
  }
}

</mosaic_0001>

<llo_original>
// kernel: forward.1
$region0: #{forward.1}
  #allocation0 [shape = 'u32[]', space=smem, size = 0x4, offset = 0x4, fixed_abs, tag = 'smem constant byte address 0x4 - core index']
  #allocation1 [shape = 'u32[72,128]{1,0:T(1,128)}', space=vmem, size = 0x9000, scoped, tag = 'internal scratch']
  %s0 = inlined_call_operand.hbm [shape: f32[2,32], index: 0, kind: input, shape index: {}]
  %s1 = inlined_call_operand.hbm [shape: f32[32,8], index: 1, kind: input, shape index: {}]
  %s2 = inlined_call_operand.vmem [shape: f32[1,8], index: 2, kind: input, shape index: {}]
  %s3 = inlined_call_operand.hbm [shape: f32[2,8], index: 3, kind: output, shape index: {}]
  %s4 = sld [smem:[#allocation0]]
  $region30: #{forward.1} parent=0
    _
  %s6 = ssub.s32 1, %s4
  %s7 = scalar_select 0, %s6, %s4
  $region1: #{forward.1} parent=0
    #allocation2 [shape = 'u8[1024]{0}', space=vmem, size = 0x400, scoped, tag = 'input window, operand 0, single buffered']
    #allocation3 [shape = 's32[1]{0}', space=sflag, size = 0x4, scoped, tag = 'scoped memory for forward.1']
    #allocation4 [shape = 's32[1]{0}', space=sflag, size = 0x4, scoped, tag = 'scoped memory for forward.1']
    #allocation5 [shape = 'u8[16384]{0}', space=vmem, size = 0x4000, scoped, tag = 'input window, operand 1, single buffered']
    #allocation6 [shape = 's32[1]{0}', space=sflag, size = 0x4, scoped, tag = 'scoped memory for forward.1']
    #allocation7 [shape = 'u8[1024]{0}', space=vmem, size = 0x400, scoped, tag = 'output window, operand 0, single buffered']
    %8 = vsyncpa [#allocation3], 0
    %9 = vsyncpa [#allocation6], 0
    %10 = vsyncpa [#allocation4], 0
    // Predicated region
    $region2: #{forward.1} parent=1 // pred_check
      _
    $region3: #{forward.1} parent=1 // pred_check_branch
      %12 = sbr.rel (0) target = $region5
    $region4: #{forward.1} parent=1 // pred_region
      %14 = vsyncadd [#allocation3], 0
      %s16 = sshll.u32 %s0, 4
      %s17 = int_to_ptr.hbm [resolvable:$true] %s16
      %s18 = sshll.u32 [#allocation2], 4
      %s19 = int_to_ptr.vmem [resolvable:$true] %s18
      %21 = dma.hbm_to_vmem [thread:$0]  %s17, 32, %s19, [#allocation3]
    $region5: #{forward.1} parent=1 // pred_fallthru
      _
    // Predicated region
    $region6: #{forward.1} parent=1 // pred_check
      _
    $region7: #{forward.1} parent=1 // pred_check_branch
      %23 = sbr.rel (0) target = $region9
    $region8: #{forward.1} parent=1 // pred_region
      %25 = vsyncadd [#allocation6], 0
      %s26 = sshll.u32 %s1, 4
      %s27 = int_to_ptr.hbm [resolvable:$true] %s26
      %s28 = sshll.u32 [#allocation5], 4
      %s29 = int_to_ptr.vmem [resolvable:$true] %s28
      %34 = dma.hbm_to_vmem [thread:$0]  %s27, 512, %s29, [#allocation6], 128, 128, 8
    $region9: #{forward.1} parent=1 // pred_fallthru
      _
    // Predicated region
    $region10: #{forward.1} parent=1 // pred_check
      _
    $region11: #{forward.1} parent=1 // pred_check_branch
      %36 = sbr.rel (0) target = $region13
    $region12: #{forward.1} parent=1 // pred_region
      _
    $region13: #{forward.1} parent=1 // pred_fallthru
      _
    // Predicated region
    $region14: #{forward.1} parent=1 // pred_check
      _
    $region15: #{forward.1} parent=1 // pred_check_branch
      %38 = sbr.rel (0) target = $region17
    $region16: #{forward.1} parent=1 // pred_region
      %40 = dma.done [#allocation3], 32
    $region17: #{forward.1} parent=1 // pred_fallthru
      _
    // Predicated region
    $region18: #{forward.1} parent=1 // pred_check
      _
    $region19: #{forward.1} parent=1 // pred_check_branch
      %42 = sbr.rel (0) target = $region21
    $region20: #{forward.1} parent=1 // pred_region
      %44 = dma.done [#allocation6], 512
    $region21: #{forward.1} parent=1 // pred_fallthru
      _
    %v45 = vld [vmem:[#allocation2] sm:$0x3]
    %v46 = vld [vmem:[#allocation5] sm:$0xff]
    %v47 = vld [vmem:[#allocation5 + $0x8] sm:$0xff]
    %v48 = vld [vmem:[#allocation5 + $0x10] sm:$0xff]
    %v49 = vld [vmem:[#allocation5 + $0x18] sm:$0xff]
    %v50 = vld [vmem:[%s2] sm:$0x1]
    %v52 = vperm.slane %v50, 0
    %vm54 = vcmask 261120
    %v56 = vsel %vm54, %v45, 0
    %58 = vmatpush.msra.mxu0 0.0
    %59 = vmatpush.msra.mxu0 0.0
    %60 = vmatpush.msra.mxu0 0.0
    %61 = vmatpush.msra.mxu0 0.0
    %62 = vmatpush.msra.mxu0 0.0
    %63 = vmatpush.msra.mxu0 0.0
    %64 = vmatpush.msra.mxu0 0.0
    %65 = vmatpush.msra.mxu0 0.0
    %66 = vmatpush.msra.mxu0 0.0
    %67 = vmatpush.msra.mxu0 0.0
    %68 = vmatpush.msra.mxu0 0.0
    %69 = vmatpush.msra.mxu0 0.0
    %70 = vmatpush.msra.mxu0 %v49
    %71 = vmatpush.msra.mxu0 %v48
    %72 = vmatpush.msra.mxu0 %v47
    %73 = vmatpush.msra.mxu0 %v46
    %74 = vmatmul.f32.gmra.mxu0 %v56
    %v75 = vpop.f32.mrf.mxu0
    %v76 = vadd.f32 %v52, %v75
    %77 = vdwg.mxu0
    %vm78 = vcmask 58368
    %79 = vst.msk [vmem:[#allocation7] sm:$0x3] %vm78, %v76
    // Predicated region
    $region22: #{forward.1} parent=1 // pred_check
      _
    $region23: #{forward.1} parent=1 // pred_check_branch
      %81 = sbr.rel (0) target = $region25
    $region24: #{forward.1} parent=1 // pred_region
      %83 = vsyncadd [#allocation4], 0
      %s85 = sshll.u32 [#allocation7], 4
      %s86 = int_to_ptr.vmem [resolvable:$true] %s85
      %s87 = sshll.u32 %s3, 4
      %s88 = int_to_ptr.hbm [resolvable:$true] %s87
      %90 = dma.vmem_to_hbm [thread:$0]  %s86, 32, %s88, [#allocation4]
    $region25: #{forward.1} parent=1 // pred_fallthru
      _
    // Predicated region
    $region26: #{forward.1} parent=1 // pred_check
      _
    $region27: #{forward.1} parent=1 // pred_check_branch
      %92 = sbr.rel (0) target = $region29
    $region28: #{forward.1} parent=1 // pred_region
      %94 = dma.done [#allocation4], 32
    $region29: #{forward.1} parent=1 // pred_fallthru
      _
    %95 = vsyncpa [#allocation3], 1
    %96 = vsyncpa [#allocation6], 1
    %97 = vsyncpa [#allocation4], 1

</llo_original>
